<compile_context>
chip_gen: v7x
topology: tpu7x:2x2x1
jax: 0.10.0
libtpu: 0.0.40
codegen_flags: <defaults>
</compile_context>

<pallas_src>
import functools

import jax
import jax.numpy as jnp
from jax.experimental import pallas as pl
from jax.experimental.pallas import tpu as pltpu

DEFAULT_FXP_CONFIG = {'MEL_COEFF': [8, 6], 'MEL_OUT': [10, 6]}


# ---------------------------------------------------------------------------
# Parameter generation (plain JAX glue, host-side) — mirrors
# torchaudio.functional.melscale_fbanks (HTK mel scale, norm=None) followed by
# MEL_COEFF fixed-point quantization with nearest rounding.
# ---------------------------------------------------------------------------
def _hz_to_mel_htk(f):
    return 2595.0 * jnp.log10(1.0 + f / 700.0)


def _mel_to_hz_htk(m):
    return 700.0 * (10.0 ** (m / 2595.0) - 1.0)


def _fxp_quantize(x, wl, fl, rounding):
    scale = 2.0 ** fl
    inv_scale = 2.0 ** (-fl)
    if rounding == 'nearest':
        # NOTE: jnp.round is round-half-to-even; qtorch 'nearest' may tie-break
        # differently (ties are essentially never hit for these coefficients).
        q = jnp.round(x * scale) * inv_scale
    else:  # 'floor'
        q = jnp.floor(x * scale) * inv_scale
    t_max = 2.0 ** (wl - fl - 1) - 2.0 ** (-fl)
    t_min = -(2.0 ** (wl - fl - 1))
    return jnp.clip(q, t_min, t_max)


def gen_mel_fbank(n_freqs=257, n_mels=40, sample_rate=16000,
                  fxp_config=DEFAULT_FXP_CONFIG):
    f_min = 0.0
    f_max = float(sample_rate // 2)
    all_freqs = jnp.linspace(0.0, f_max, n_freqs)
    m_min = _hz_to_mel_htk(f_min)
    m_max = _hz_to_mel_htk(f_max)
    m_pts = jnp.linspace(m_min, m_max, n_mels + 2)
    f_pts = _mel_to_hz_htk(m_pts)
    f_diff = f_pts[1:] - f_pts[:-1]                       # (n_mels+1,)
    slopes = f_pts[None, :] - all_freqs[:, None]          # (n_freqs, n_mels+2)
    down_slopes = (-1.0 * slopes[:, :-2]) / f_diff[:-1]   # (n_freqs, n_mels)
    up_slopes = slopes[:, 2:] / f_diff[1:]                # (n_freqs, n_mels)
    fb = jnp.maximum(0.0, jnp.minimum(down_slopes, up_slopes))
    wl, fl = fxp_config['MEL_COEFF']
    fb = _fxp_quantize(fb, wl, fl, rounding='nearest')
    return fb.astype(jnp.float32)


# ---------------------------------------------------------------------------
# Pallas kernel: fused matmul (MXU, transposed output tile) + MEL_OUT
# fixed-point quantization (VPU) with lane-dense stores.
# ---------------------------------------------------------------------------
def _melfbank_kernel(x_ref, fbt_ref, o_ref, *, wl, fl, compute_dtype):
    # x_ref:   (tile_t, F)   activation tile (f32 straight from HBM)
    # fbt_ref: (M, F)        transposed mel filterbank, resident across grid
    # o_ref:   (M, tile_t)   lane-dense output tile
    x = x_ref[...]
    fbt = fbt_ref[...]
    if compute_dtype is not None and x.dtype != jnp.dtype(compute_dtype):
        # In-kernel cast (VPU) — hides under the DMA; no extra HBM pass.
        x = x.astype(compute_dtype)
        fbt = fbt.astype(compute_dtype)
    out = jnp.einsum('mf,tf->mt', fbt, x,
                     preferred_element_type=jnp.float32)
    # fixed_point_quantize(out, wl, fl, rounding='floor'), clamp, non-symmetric
    scale = float(2.0 ** fl)
    inv_scale = float(2.0 ** (-fl))          # exact power of two: mul == div
    t_max = float(2.0 ** (wl - fl - 1) - 2.0 ** (-fl))
    t_min = float(-(2.0 ** (wl - fl - 1)))
    q = jnp.clip(jnp.floor(out * scale) * inv_scale, t_min, t_max)
    o_ref[...] = q.astype(o_ref.dtype)


def _round_up(v, m):
    return (v + m - 1) // m * m


def melfbank_forward(x, fbank, fxp_config=DEFAULT_FXP_CONFIG,
                     compute_dtype=jnp.float32, out_dtype=jnp.float32,
                     max_tile_t=2048, min_grid_steps=4):
    """x: (B, T, n_freqs) float32 -> (B, n_mels, T) out_dtype."""
    B, T, F = x.shape
    Fb, M = fbank.shape
    assert F == Fb
    wl, fl = fxp_config['MEL_OUT']

    # ---- Time-axis tile selection -----------------------------------------
    # tile_t is either the full T (always a legal block dim) or a multiple of
    # 128 (unmasked, lane-dense output stores; ragged tail handled by cdiv
    # grid padding).
    assert max_tile_t % 128 == 0
    tile_t = min(T, max_tile_t)
    if tile_t % 128 == 0:
        # v7x core balance: keep enough grid steps for both TensorCores, but
        # never shrink below 512 (per-step overhead amortization).
        while (B * pl.cdiv(T, tile_t) < min_grid_steps
               and tile_t % 256 == 0 and tile_t // 2 >= 512):
            tile_t //= 2

    # fb^T: (M, F). Tiny (40x257); transposed once in the wrapper, resident
    # in VMEM across the whole grid.
    fbt = jnp.transpose(fbank)

    kernel = functools.partial(_melfbank_kernel, wl=wl, fl=fl,
                               compute_dtype=compute_dtype)

    grid = (B, pl.cdiv(T, tile_t))

    # ---- VMEM budget (explicit limit; v7x physical is 64 MiB) --------------
    f_pad = _round_up(F, 128)
    m_pad = _round_up(M, 8)
    t_pad = _round_up(tile_t, 128)
    x_item = jnp.dtype(x.dtype).itemsize
    o_item = jnp.dtype(out_dtype).itemsize
    est = (2 * tile_t * f_pad * x_item          # double-buffered x tiles
           + 2 * m_pad * t_pad * max(o_item, 4)  # double-buffered out tiles
           + 2 * m_pad * f_pad * jnp.dtype(fbank.dtype).itemsize)  # fbank
    vmem_limit = int(min(64 << 20, max(32 << 20, int(est * 1.5) + (1 << 20))))

    bytes_accessed = (x.size * x_item
                      + fbt.size * jnp.dtype(fbank.dtype).itemsize
                      + B * M * T * o_item)

    out = pl.pallas_call(
        kernel,
        out_shape=jax.ShapeDtypeStruct((B, M, T), out_dtype),
        grid=grid,
        in_specs=[
            # x tile: batch squeezed, (tile_t, F) in VMEM, double-buffered.
            pl.BlockSpec((None, tile_t, F), lambda b, t: (b, t, 0)),
            # fb^T: single small block, stays resident across the grid.
            pl.BlockSpec((M, F), lambda b, t: (0, 0)),
        ],
        out_specs=pl.BlockSpec((None, M, tile_t), lambda b, t: (b, 0, t)),
        compiler_params=pltpu.CompilerParams(
            dimension_semantics=("parallel", "parallel"),
            vmem_limit_bytes=vmem_limit),
        cost_estimate=pl.CostEstimate(
            flops=2 * B * T * F * M,
            transcendentals=0,
            bytes_accessed=bytes_accessed),
    )(x, fbt)
    return out


if __name__ == "__main__":
    n_freqs, n_mels, sample_rate = 257, 40, 16000
    B, T = 2, 8

    fbank = gen_mel_fbank(n_freqs=n_freqs, n_mels=n_mels,
                          sample_rate=sample_rate)

    key = jax.random.PRNGKey(0)
    # Non-negative "spectrogram-like" input.
    x = jax.random.uniform(key, (B, T, n_freqs), dtype=jnp.float32,
                           minval=0.0, maxval=2.0)

    out = melfbank_forward(x, fbank)
    out = jax.block_until_ready(out)

    assert out.shape == (B, n_mels, T), out.shape
    assert out.dtype == jnp.float32

    # Pure-JAX f32 reference (highest precision) of the PyTorch forward.
    wl, fl = DEFAULT_FXP_CONFIG['MEL_OUT']
    ref = jnp.einsum('btf,fm->btm', x, fbank,
                     preferred_element_type=jnp.float32,
                     precision=jax.lax.Precision.HIGHEST)
    ref = jnp.clip(jnp.floor(ref * 2.0 ** fl) * 2.0 ** (-fl),
                   -(2.0 ** (wl - fl - 1)),
                   2.0 ** (wl - fl - 1) - 2.0 ** (-fl))
    ref = jnp.transpose(ref, (0, 2, 1))
    max_err = float(jnp.max(jnp.abs(out - ref)))
    # Allow one fixed-point LSB for accumulation-order floor-boundary flips.
    assert max_err <= 2.0 ** (-fl) + 1e-6, max_err

    print("KERNEL_OK")
</pallas_src>

<mosaic_0001>
module attributes {stable_mosaic.version = 11 : i64} {
  func.func @_melfbank_kernel(%arg0: i32, %arg1: i32, %arg2: memref<1x8x257xf32, #tpu.memory_space<vmem>>, %arg3: memref<40x257xf32, #tpu.memory_space<vmem>>, %arg4: memref<1x40x8xf32, #tpu.memory_space<vmem>>) attributes {dimension_semantics = [#tpu.dimension_semantics<parallel>, #tpu.dimension_semantics<parallel>], iteration_bounds = array<i64: 2, 1>, scalar_prefetch = 0 : i64, scratch_operands = 0 : i64, tpu.core_type = #tpu.core_type<tc>, window_params = [{transform_indices = @transform_0, window_bounds = array<i64: 1, 8, 257>}, {pipeline_mode = #tpu.pipeline_mode<synchronous>, transform_indices = @transform_1, window_bounds = array<i64: 40, 257>}, {transform_indices = @transform_2, window_bounds = array<i64: 1, 40, 8>}]} {
    %c0 = arith.constant 0 : index
    %c0_0 = arith.constant 0 : index
    %c0_1 = arith.constant 0 : index
    %0 = vector.load %arg2[%c0, %c0_0, %c0_1] : memref<1x8x257xf32, #tpu.memory_space<vmem>>, vector<1x8x257xf32>
    %1 = vector.shape_cast %0 : vector<1x8x257xf32> to vector<8x257xf32>
    %c0_2 = arith.constant 0 : index
    %c0_3 = arith.constant 0 : index
    %2 = vector.load %arg3[%c0_2, %c0_3] : memref<40x257xf32, #tpu.memory_space<vmem>>, vector<40x257xf32>
    "tpu.trace_start"() <{level = 10 : i32, message = "mf,tf->mt"}> : () -> ()
    %cst = arith.constant dense<0.000000e+00> : vector<40x8xf32>
    %3 = tpu.matmul %2, %1, %cst {dimension_numbers = #tpu.dot_dimension_numbers<[1], [1], [0], [0], [0, 0, 1, 0], [], []>} : vector<40x257xf32>, vector<8x257xf32>, vector<40x8xf32> -> vector<40x8xf32>
    "tpu.trace_stop"() : () -> ()
    %cst_4 = arith.constant 6.400000e+01 : f32
    %4 = vector.broadcast %cst_4 : f32 to vector<40x8xf32>
    %5 = arith.mulf %3, %4 : vector<40x8xf32>
    %6 = math.floor %5 : vector<40x8xf32>
    %cst_5 = arith.constant 1.562500e-02 : f32
    %7 = vector.broadcast %cst_5 : f32 to vector<40x8xf32>
    %8 = arith.mulf %6, %7 : vector<40x8xf32>
    %cst_6 = arith.constant -8.000000e+00 : f32
    %cst_7 = arith.constant 7.984375 : f32
    %9 = vector.broadcast %cst_6 : f32 to vector<40x8xf32>
    %10 = arith.maximumf %9, %8 : vector<40x8xf32>
    %11 = vector.broadcast %cst_7 : f32 to vector<40x8xf32>
    %12 = arith.minimumf %11, %10 : vector<40x8xf32>
    %c0_8 = arith.constant 0 : index
    %c0_9 = arith.constant 0 : index
    %c0_10 = arith.constant 0 : index
    %13 = vector.load %arg4[%c0_8, %c0_9, %c0_10] : memref<1x40x8xf32, #tpu.memory_space<vmem>>, vector<1x40x8xf32>
    %14 = vector.shape_cast %13 : vector<1x40x8xf32> to vector<40x8xf32>
    %15 = vector.shape_cast %12 : vector<40x8xf32> to vector<1x40x8xf32>
    tpu.vector_store %arg4[%c0_8, %c0_9, %c0_10], %15 {strides = array<i32>} : memref<1x40x8xf32, #tpu.memory_space<vmem>>, vector<1x40x8xf32>,
    return
  }
  func.func @transform_0(%arg0: i32, %arg1: i32) -> (i32, i32, i32) {
    %c0_i32 = arith.constant 0 : i32
    %c0_i32_0 = arith.constant 0 : i32
    return %arg0, %arg1, %c0_i32 : i32, i32, i32
  }
  func.func @transform_1(%arg0: i32, %arg1: i32) -> (i32, i32) {
    %c0_i32 = arith.constant 0 : i32
    %c0_i32_0 = arith.constant 0 : i32
    %c0_i32_1 = arith.constant 0 : i32
    return %c0_i32, %c0_i32_0 : i32, i32
  }
  func.func @transform_2(%arg0: i32, %arg1: i32) -> (i32, i32, i32) {
    %c0_i32 = arith.constant 0 : i32
    %c0_i32_0 = arith.constant 0 : i32
    return %arg0, %c0_i32, %arg1 : i32, i32, i32
  }
}

</mosaic_0001>

<llo_original>
// kernel: tpu_custom_call.1
$region0: #{tpu_custom_call.1}
  #allocation0 [shape = 'u32[]', space=smem, size = 0x4, offset = 0x4, fixed_abs, tag = 'smem constant byte address 0x4 - core index']
  #allocation1 [shape = 'u32[144,128]{1,0:T(1,128)}', space=vmem, size = 0x12000, scoped, tag = 'internal scratch']
  %s0 = inlined_call_operand.hbm [shape: f32[2,8,257], index: 0, kind: input, shape index: {}]
  %s1 = inlined_call_operand.hbm [shape: f32[40,257], index: 1, kind: input, shape index: {}]
  %s2 = inlined_call_operand.vmem [shape: f32[2,40,8], index: 2, kind: output, shape index: {}]
  %s3 = sld [smem:[#allocation0]]
  $region49: #{tpu_custom_call.1} parent=0
    _
  %s5 = ssub.s32 1, %s3
  %s6 = scalar_select 0, %s5, %s3
  $region1: #{tpu_custom_call.1} parent=0
    #allocation2 [shape = 'u8[24576]{0}', space=vmem, size = 0x6000, scoped, tag = 'input window, operand 0']
    #allocation3 [shape = 's32[2]{0}', space=sflag, size = 0x8, scoped, tag = 'scoped memory for tpu_custom_call.1']
    #allocation4 [shape = 'u8[61440]{0}', space=vmem, size = 0xf000, scoped, tag = 'input window, operand 1, single buffered']
    #allocation5 [shape = 's32[1]{0}', space=sflag, size = 0x4, scoped, tag = 'scoped memory for tpu_custom_call.1']
    %7 = vsyncpa [#allocation3], 0
    %s8 = scalar_lea.sflag [#allocation3], 1
    %9 = vsyncpa %s8, 0
    %10 = vsyncpa [#allocation5], 0
    loop: start=0, step=1, limit=4
    $region2: #{tpu_custom_call.1} parent=1 // loop_pre_header
      _
    $region3: #{tpu_custom_call.1} parent=1 // loop_header
      %s12 = sphi 0, %s16
      %p13 = scmp.ge.s32.totalorder %s12, 4
      %s19 = sphi 0, %s31
      %s20 = sphi 0, %s27
      %s21 = sphi 0, %s19
      %s22 = sphi 0, %s20
      %s23 = sphi 0, %s21
      %s24 = sphi 0, %s22
      %s36 = sphi 0, %s38
      %s39 = sphi 0, %s36
      %s40 = sphi 0, %s39
      %s56 = sphi 0, %s40
      %s60 = sphi 0, %s60
      %s62 = sphi 0, %s60
      %s63 = sphi 0, %s62
      %s77 = sphi 0, %s63
      %s85 = sphi 0, %s87
      %s88 = sphi 0, %s85
      %s89 = sphi 0, %s88
      %s105 = sphi 0, %s89
    $region4: #{tpu_custom_call.1} parent=1 // loop_header_branch
      %15 = sbr.rel (%p13) target = $region8
    $region5: #{tpu_custom_call.1} parent=1 // loop_body
      %s17 = ssub.s32 %s12, 1
      %s18 = ssub.s32 %s12, 2
      %s25 = sadd.s32 1, %s20
      %p26 = scmp.ge.s32.totalorder %s25, 1
      %s27 = scalar_select %p26, 0, %s25
      %s28 = sadd.s32 1, %s19
      %s29 = scalar_select %p26, %s28, %s19
      %p30 = scmp.ge.s32.totalorder %s29, 2
      %s31 = scalar_select %p30, 0, %s29
      %s32 = ssub.s32 %s19, %s31
      %s33 = ssub.s32 %s20, %s27
      %s34 = sor.u32 %s32, %s33
      %p35 = scmp.eq.s32.totalorder %s34, 0
      %s37 = sadd.s32 %s36, 1
      %s38 = scalar_select %p35, %s36, %s37
      %p41 = pneg %p35
      %p42 = scmp.eq.s32.totalorder %s12, 1
      %p43 = por %p41, %p42
      %p44 = scmp.ne.s32.totalorder %s36, %s39
      %p45 = scmp.eq.s32.totalorder %s12, 0
      %p46 = por %p44, %p45
      %p47 = scmp.ne.s32.totalorder %s36, %s39
      %p48 = scmp.eq.s32.totalorder %s17, 1
      %p49 = por %p47, %p48
      %p50 = scmp.ne.s32.totalorder %s39, %s40
      %p51 = scmp.eq.s32.totalorder %s17, 0
      %p52 = por %p50, %p51
      %p53 = scmp.ne.s32.totalorder %s39, %s40
      %p54 = scmp.eq.s32.totalorder %s18, 1
      %p55 = por %p53, %p54
      %p57 = scmp.ne.s32.totalorder %s40, %s56
      %p58 = scmp.eq.s32.totalorder %s18, 0
      %p59 = por %p57, %p58
      %s61 = sadd.s32 %s60, 1
      %p64 = scmp.eq.s32.totalorder %s12, 1
      %p65 = scmp.ne.s32.totalorder %s60, %s62
      %p66 = scmp.eq.s32.totalorder %s12, 0
      %p67 = por %p65, %p66
      %p68 = scmp.ne.s32.totalorder %s60, %s62
      %p69 = scmp.eq.s32.totalorder %s17, 1
      %p70 = por %p68, %p69
      %p71 = scmp.ne.s32.totalorder %s62, %s63
      %p72 = scmp.eq.s32.totalorder %s17, 0
      %p73 = por %p71, %p72
      %p74 = scmp.ne.s32.totalorder %s62, %s63
      %p75 = scmp.eq.s32.totalorder %s18, 1
      %p76 = por %p74, %p75
      %p78 = scmp.ne.s32.totalorder %s63, %s77
      %p79 = scmp.eq.s32.totalorder %s18, 0
      %p80 = por %p78, %p79
      %s81 = ssub.s32 %s19, %s31
      %s82 = ssub.s32 %s20, %s27
      %s83 = sor.u32 %s81, %s82
      %p84 = scmp.eq.s32.totalorder %s83, 0
      %s86 = sadd.s32 %s85, 1
      %s87 = scalar_select %p84, %s85, %s86
      %p90 = pneg %p84
      %p91 = scmp.eq.s32.totalorder %s12, 1
      %p92 = por %p90, %p91
      %p93 = scmp.ne.s32.totalorder %s85, %s88
      %p94 = scmp.eq.s32.totalorder %s12, 0
      %p95 = por %p93, %p94
      %p96 = scmp.ne.s32.totalorder %s85, %s88
      %p97 = scmp.eq.s32.totalorder %s17, 1
      %p98 = por %p96, %p97
      %p99 = scmp.ne.s32.totalorder %s88, %s89
      %p100 = scmp.eq.s32.totalorder %s17, 0
      %p101 = por %p99, %p100
      %p102 = scmp.ne.s32.totalorder %s88, %s89
      %p103 = scmp.eq.s32.totalorder %s18, 1
      %p104 = por %p102, %p103
      %p106 = scmp.ne.s32.totalorder %s89, %s105
      %p107 = scmp.eq.s32.totalorder %s18, 0
      %p108 = por %p106, %p107
      %p109 = scmp.le.s32.totalorder 1, %s12
      %p110 = scmp.lt.s32.totalorder %s12, 3
      %p111 = pnand %p109, %p110
      %p112 = pneg %p111
      // Predicated region
      $region9: #{tpu_custom_call.1} parent=5 // pred_check
        _
      $region10: #{tpu_custom_call.1} parent=5 // pred_check_branch
        %114 = sbr.rel (%p111) target = $region12
      $region11: #{tpu_custom_call.1} parent=5 // pred_region
        %s115 = ssub.s32 %s12, 1
        // Predicated region
        $region13: #{tpu_custom_call.1} parent=11 // pred_check
          %p116 = pneg %p73
        $region14: #{tpu_custom_call.1} parent=11 // pred_check_branch
          %118 = sbr.rel (%p116) target = $region16
        $region15: #{tpu_custom_call.1} parent=11 // pred_region
          %s120 = ssub.s32 1920, 1920
          %121 = vsyncadd [#allocation5], %s120
          %s122 = sshll.u32 [#allocation4], 4
          %s123 = int_to_ptr.vmem [resolvable:$true] %s122
          %128 = dma.hbm_to_vmem [thread:$0]  %s1, 1920, %s123, [#allocation5], 384, 384, 24
        $region16: #{tpu_custom_call.1} parent=11 // pred_fallthru
          _
      $region12: #{tpu_custom_call.1} parent=5 // pred_fallthru
        _
      %p129 = scmp.lt.s32.totalorder %s12, 2
      // Predicated region
      $region17: #{tpu_custom_call.1} parent=5 // pred_check
        %p130 = pneg %p129
      $region18: #{tpu_custom_call.1} parent=5 // pred_check_branch
        %132 = sbr.rel (%p130) target = $region20
      $region19: #{tpu_custom_call.1} parent=5 // pred_region
        // Predicated region
        $region21: #{tpu_custom_call.1} parent=19 // pred_check
          %p133 = pneg %p46
        $region22: #{tpu_custom_call.1} parent=19 // pred_check_branch
          %135 = sbr.rel (%p133) target = $region24
        $region23: #{tpu_custom_call.1} parent=19 // pred_region
          %s136 = sand.u32 %s36, 1
          %s137 = scalar_lea.sflag [#allocation3], %s136
          %s138 = sand.u32 %s36, 1
          %s139 = smul.addr %s138, 24
          %s140 = scalar_lea.vmem [#allocation2], %s139
          %s142 = ssub.s32 384, 384
          %143 = vsyncadd %s137, %s142
          %s144 = smul.addr %s20, 3
          %s145 = smul.addr %s19, 3
          %s146 = sadd.s32 %s144, %s145
          %s147 = smul.addr %s146, 128
          %s148 = scalar_lea.hbm %s0, %s147
          %s150 = sshll.u32 %s140, 4
          %s151 = int_to_ptr.vmem [resolvable:$true] %s150
          %153 = dma.hbm_to_vmem [thread:$0]  %s148, 384, %s151, %s137
        $region24: #{tpu_custom_call.1} parent=19 // pred_fallthru
          _
      $region20: #{tpu_custom_call.1} parent=5 // pred_fallthru
        _
      %p154 = scmp.le.s32.totalorder 1, %s12
      %p155 = scmp.lt.s32.totalorder %s12, 3
      %p156 = pnand %p154, %p155
      %p157 = pneg %p156
      // Predicated region
      $region25: #{tpu_custom_call.1} parent=5 // pred_check
        _
      $region26: #{tpu_custom_call.1} parent=5 // pred_check_branch
        %159 = sbr.rel (%p156) target = $region28
      $region27: #{tpu_custom_call.1} parent=5 // pred_region
        %s160 = ssub.s32 %s12, 1
        %s161 = sand.u32 %s39, 1
        %s162 = scalar_lea.sflag [#allocation3], %s161
        %s163 = sand.u32 %s39, 1
        %s164 = smul.addr %s163, 24
        %s165 = scalar_lea.vmem [#allocation2], %s164
        // Predicated region
        $region29: #{tpu_custom_call.1} parent=27 // pred_check
          %p166 = pneg %p52
        $region30: #{tpu_custom_call.1} parent=27 // pred_check_branch
          %168 = sbr.rel (%p166) target = $region32
        $region31: #{tpu_custom_call.1} parent=27 // pred_region
          %169 = dma.done %s162, 384
        $region32: #{tpu_custom_call.1} parent=27 // pred_fallthru
          _
        // Predicated region
        $region33: #{tpu_custom_call.1} parent=27 // pred_check
          %p170 = pneg %p73
        $region34: #{tpu_custom_call.1} parent=27 // pred_check_branch
          %172 = sbr.rel (%p170) target = $region36
        $region35: #{tpu_custom_call.1} parent=27 // pred_region
          %173 = dma.done [#allocation5], 1920
        $region36: #{tpu_custom_call.1} parent=27 // pred_fallthru
          _
        %s174 = sand.u32 %s39, 1
        %s175 = scalar_lea.sflag [#allocation3], %s174
        %s176 = sand.u32 %s39, 1
        %s177 = smul.addr %s176, 24
        %s178 = scalar_lea.vmem [#allocation2], %s177
        %p179 = pneg %p52
        %p180 = pneg %p49
        %p181 = pneg %p73
        %p182 = pneg %p70
        %p183 = pneg %p101
        %p184 = pneg %p98
        %p185 = scmp.lt.s32.totalorder %s21, 1
        %s186 = scalar_select %p185, %s21, 1
        %p187 = scmp.lt.s32.totalorder %s22, 0
        %s188 = scalar_select %p187, %s22, 0
        %s189 = smul.addr %s186, 5
        %s190 = sadd.s32 %s188, %s189
        %s191 = smul.addr %s190, 8
        %s192 = scalar_lea.vmem %s2, %s191
        %p193 = scmp.lt.s32.totalorder %s21, 1
        %s194 = scalar_select %p193, %s21, 1
        %p195 = scmp.lt.s32.totalorder %s22, 0
        %s196 = scalar_select %p195, %s22, 0
        %s197 = smul.addr %s194, 5
        %s198 = sadd.s32 %s196, %s197
        %s199 = smul.addr %s198, 8
        %s200 = scalar_lea.vmem %s2, %s199
        %v201 = vld [vmem:[%s165] sm:$0xff]
        %v202 = vld [vmem:[%s165 + $0x8] sm:$0xff]
        %v203 = vld [vmem:[%s165 + $0x10] sm:$0xff]
        %v204 = vld [vmem:[#allocation4] sm:$0xff]
        %v205 = vld [vmem:[#allocation4 + $0x8] sm:$0xff]
        %v206 = vld [vmem:[#allocation4 + $0x10] sm:$0xff]
        %v207 = vld [vmem:[#allocation4 + $0x18] sm:$0xff]
        %v208 = vld [vmem:[#allocation4 + $0x20] sm:$0xff]
        %v209 = vld [vmem:[#allocation4 + $0x28] sm:$0xff]
        %v210 = vld [vmem:[#allocation4 + $0x30] sm:$0xff]
        %v211 = vld [vmem:[#allocation4 + $0x38] sm:$0xff]
        %v212 = vld [vmem:[#allocation4 + $0x40] sm:$0xff]
        %v213 = vld [vmem:[#allocation4 + $0x48] sm:$0xff]
        %v214 = vld [vmem:[#allocation4 + $0x50] sm:$0xff]
        %v215 = vld [vmem:[#allocation4 + $0x58] sm:$0xff]
        %v216 = vld [vmem:[#allocation4 + $0x60] sm:$0xff]
        %v217 = vld [vmem:[#allocation4 + $0x68] sm:$0xff]
        %v218 = vld [vmem:[#allocation4 + $0x70] sm:$0xff]
        %vm219 = vcmask 7168
        %v221 = vsel %vm219, %v206, 0
        %v224 = vsel %vm219, %v209, 0
        %v227 = vsel %vm219, %v212, 0
        %v230 = vsel %vm219, %v215, 0
        %v233 = vsel %vm219, %v218, 0
        %v236 = vsel %vm219, %v203, 0
        %238 = vmatprep.subr.mxu0 %v202
        %239 = vmatpush1.xpose.msra.mxu0 %v201
        %240 = vmatprep.subr.mxu0 0.0
        %241 = vmatpush1.xpose.msra.mxu0 0.0
        %242 = vmatprep.subr.mxu0 0.0
        %243 = vmatpush1.xpose.msra.mxu0 0.0
        %244 = vmatprep.subr.mxu0 0.0
        %245 = vmatpush1.xpose.msra.mxu0 0.0
        %246 = vmatprep.subr.mxu0 0.0
        %247 = vmatpush1.xpose.msra.mxu0 0.0
        %248 = vmatprep.subr.mxu0 0.0
        %249 = vmatpush1.xpose.msra.mxu0 0.0
        %250 = vmatprep.subr.mxu0 0.0
        %251 = vmatpush1.xpose.msra.mxu0 0.0
        %252 = vmatprep.subr.mxu0 0.0
        %253 = vmatpush1.xpose.msra.mxu0 0.0
        %254 = vmatprep.subr.mxu0 0.0
        %255 = vmatpush1.xpose.msra.mxu0 0.0
        %256 = vmatprep.subr.mxu0 0.0
        %257 = vmatpush1.xpose.msra.mxu0 0.0
        %258 = vmatprep.subr.mxu0 0.0
        %259 = vmatpush1.xpose.msra.mxu0 0.0
        %260 = vmatprep.subr.mxu0 0.0
        %261 = vmatpush1.xpose.msra.mxu0 0.0
        %262 = vmatprep.subr.mxu0 0.0
        %263 = vmatpush1.xpose.msra.mxu0 0.0
        %264 = vmatprep.subr.mxu0 0.0
        %265 = vmatpush1.xpose.msra.mxu0 0.0
        %266 = vmatprep.subr.mxu0 0.0
        %267 = vmatpush1.xpose.msra.mxu0 0.0
        %268 = vmatprep.subr.mxu0 0.0
        %269 = vmatpush1.xpose.msra.mxu0 0.0
        %270 = vmatprep.subr.mxu0 0.0
        %271 = vmatpush1.xpose.msra.mxu0 0.0
        %272 = vmatprep.subr.mxu0 0.0
        %273 = vmatpush1.xpose.msra.mxu0 0.0
        %274 = vmatprep.subr.mxu0 0.0
        %275 = vmatpush1.xpose.msra.mxu0 0.0
        %276 = vmatprep.subr.mxu0 0.0
        %277 = vmatpush1.xpose.msra.mxu0 0.0
        %278 = vmatprep.subr.mxu0 0.0
        %279 = vmatpush1.xpose.msra.mxu0 0.0
        %280 = vmatprep.subr.mxu0 0.0
        %281 = vmatpush1.xpose.msra.mxu0 0.0
        %282 = vmatprep.subr.mxu0 0.0
        %283 = vmatpush1.xpose.msra.mxu0 0.0
        %284 = vmatprep.subr.mxu0 0.0
        %285 = vmatpush1.xpose.msra.mxu0 0.0
        %286 = vmatprep.subr.mxu0 0.0
        %287 = vmatpush1.xpose.msra.mxu0 0.0
        %288 = vmatprep.subr.mxu0 0.0
        %289 = vmatpush1.xpose.msra.mxu0 0.0
        %290 = vmatprep.subr.mxu0 0.0
        %291 = vmatpush1.xpose.msra.mxu0 0.0
        %292 = vmatprep.subr.mxu0 0.0
        %293 = vmatpush1.xpose.msra.mxu0 0.0
        %294 = vmatprep.subr.mxu0 0.0
        %295 = vmatpush1.xpose.msra.mxu0 0.0
        %296 = vmatprep.subr.mxu0 0.0
        %297 = vmatpush1.xpose.msra.mxu0 0.0
        %298 = vmatprep.subr.mxu0 0.0
        %299 = vmatpush1.xpose.msra.mxu0 0.0
        %300 = vmatprep.subr.mxu0 0.0
        %301 = vmatpush1.xpose.msra.mxu0 0.0
        %302 = vmatprep.mubr.f32.mxu0 %v205
        %303 = vmatmul.mubr.f32.gmra.mrb[0].mxu0 %v204
        %v304 = vpop.f32.mrb[0].mxu0
        %v305 = vadd.f32 0.0, %v304
        %v306 = vpop.f32.mrb[0].mxu0
        %307 = vmatprep.mubr.f32.mxu0 %v208
        %308 = vmatmul.mubr.f32.gmra.mrb[0].mxu0 %v207
        %v309 = vpop.f32.mrb[0].mxu0
        %v310 = vadd.f32 0.0, %v309
        %v311 = vpop.f32.mrb[0].mxu0
        %312 = vmatprep.mubr.f32.mxu0 %v211
        %313 = vmatmul.mubr.f32.gmra.mrb[0].mxu0 %v210
        %v314 = vpop.f32.mrb[0].mxu0
        %v315 = vadd.f32 0.0, %v314
        %v316 = vpop.f32.mrb[0].mxu0
        %317 = vmatprep.mubr.f32.mxu0 %v214
        %318 = vmatmul.mubr.f32.gmra.mrb[0].mxu0 %v213
        %v319 = vpop.f32.mrb[0].mxu0
        %v320 = vadd.f32 0.0, %v319
        %v321 = vpop.f32.mrb[0].mxu0
        %322 = vmatprep.mubr.f32.mxu0 %v217
        %323 = vmatmul.mubr.f32.gmra.mrb[0].mxu0 %v216
        %v324 = vpop.f32.mrb[0].mxu0
        %v325 = vadd.f32 0.0, %v324
        %v326 = vpop.f32.mrb[0].mxu0
        %327 = vdwg.mxu0
        %328 = vmatprep.subr.mxu0 0.0
        %329 = vmatpush1.xpose.msra.mxu0 %v236
        %330 = vmatprep.subr.mxu0 0.0
        %331 = vmatpush1.xpose.msra.mxu0 0.0
        %332 = vmatprep.subr.mxu0 0.0
        %333 = vmatpush1.xpose.msra.mxu0 0.0
        %334 = vmatprep.subr.mxu0 0.0
        %335 = vmatpush1.xpose.msra.mxu0 0.0
        %336 = vmatprep.subr.mxu0 0.0
        %337 = vmatpush1.xpose.msra.mxu0 0.0
        %338 = vmatprep.subr.mxu0 0.0
        %339 = vmatpush1.xpose.msra.mxu0 0.0
        %340 = vmatprep.subr.mxu0 0.0
        %341 = vmatpush1.xpose.msra.mxu0 0.0
        %342 = vmatprep.subr.mxu0 0.0
        %343 = vmatpush1.xpose.msra.mxu0 0.0
        %344 = vmatprep.subr.mxu0 0.0
        %345 = vmatpush1.xpose.msra.mxu0 0.0
        %346 = vmatprep.subr.mxu0 0.0
        %347 = vmatpush1.xpose.msra.mxu0 0.0
        %348 = vmatprep.subr.mxu0 0.0
        %349 = vmatpush1.xpose.msra.mxu0 0.0
        %350 = vmatprep.subr.mxu0 0.0
        %351 = vmatpush1.xpose.msra.mxu0 0.0
        %352 = vmatprep.subr.mxu0 0.0
        %353 = vmatpush1.xpose.msra.mxu0 0.0
        %354 = vmatprep.subr.mxu0 0.0
        %355 = vmatpush1.xpose.msra.mxu0 0.0
        %356 = vmatprep.subr.mxu0 0.0
        %357 = vmatpush1.xpose.msra.mxu0 0.0
        %358 = vmatprep.subr.mxu0 0.0
        %359 = vmatpush1.xpose.msra.mxu0 0.0
        %360 = vmatprep.subr.mxu0 0.0
        %361 = vmatpush1.xpose.msra.mxu0 0.0
        %362 = vmatprep.subr.mxu0 0.0
        %363 = vmatpush1.xpose.msra.mxu0 0.0
        %364 = vmatprep.subr.mxu0 0.0
        %365 = vmatpush1.xpose.msra.mxu0 0.0
        %366 = vmatprep.subr.mxu0 0.0
        %367 = vmatpush1.xpose.msra.mxu0 0.0
        %368 = vmatprep.subr.mxu0 0.0
        %369 = vmatpush1.xpose.msra.mxu0 0.0
        %370 = vmatprep.subr.mxu0 0.0
        %371 = vmatpush1.xpose.msra.mxu0 0.0
        %372 = vmatprep.subr.mxu0 0.0
        %373 = vmatpush1.xpose.msra.mxu0 0.0
        %374 = vmatprep.subr.mxu0 0.0
        %375 = vmatpush1.xpose.msra.mxu0 0.0
        %376 = vmatprep.subr.mxu0 0.0
        %377 = vmatpush1.xpose.msra.mxu0 0.0
        %378 = vmatprep.subr.mxu0 0.0
        %379 = vmatpush1.xpose.msra.mxu0 0.0
        %380 = vmatprep.subr.mxu0 0.0
        %381 = vmatpush1.xpose.msra.mxu0 0.0
        %382 = vmatprep.subr.mxu0 0.0
        %383 = vmatpush1.xpose.msra.mxu0 0.0
        %384 = vmatprep.subr.mxu0 0.0
        %385 = vmatpush1.xpose.msra.mxu0 0.0
        %386 = vmatprep.subr.mxu0 0.0
        %387 = vmatpush1.xpose.msra.mxu0 0.0
        %388 = vmatprep.subr.mxu0 0.0
        %389 = vmatpush1.xpose.msra.mxu0 0.0
        %390 = vmatprep.subr.mxu0 0.0
        %391 = vmatpush1.xpose.msra.mxu0 0.0
        %392 = vmatprep.mubr.f32.mxu0 0.0
        %393 = vmatmul.mubr.f32.gmra.mrb[0].mxu0 %v221
        %v394 = vpop.f32.mrb[0].mxu0
        %v395 = vadd.f32 %v305, %v394
        %v396 = vpop.f32.mrb[0].mxu0
        %397 = vmatprep.mubr.f32.mxu0 0.0
        %398 = vmatmul.mubr.f32.gmra.mrb[0].mxu0 %v224
        %v399 = vpop.f32.mrb[0].mxu0
        %v400 = vadd.f32 %v310, %v399
        %v401 = vpop.f32.mrb[0].mxu0
        %402 = vmatprep.mubr.f32.mxu0 0.0
        %403 = vmatmul.mubr.f32.gmra.mrb[0].mxu0 %v227
        %v404 = vpop.f32.mrb[0].mxu0
        %v405 = vadd.f32 %v315, %v404
        %v406 = vpop.f32.mrb[0].mxu0
        %407 = vmatprep.mubr.f32.mxu0 0.0
        %408 = vmatmul.mubr.f32.gmra.mrb[0].mxu0 %v230
        %v409 = vpop.f32.mrb[0].mxu0
        %v410 = vadd.f32 %v320, %v409
        %v411 = vpop.f32.mrb[0].mxu0
        %412 = vmatprep.mubr.f32.mxu0 0.0
        %413 = vmatmul.mubr.f32.gmra.mrb[0].mxu0 %v233
        %v414 = vpop.f32.mrb[0].mxu0
        %v415 = vadd.f32 %v325, %v414
        %v416 = vpop.f32.mrb[0].mxu0
        %417 = vdwg.mxu0
        %v418 = vmul.f32 %v395, 64.0
        %v419 = vmul.f32 %v400, 64.0
        %v420 = vmul.f32 %v405, 64.0
        %v421 = vmul.f32 %v410, 64.0
        %v422 = vmul.f32 %v415, 64.0
        %v423 = vfloor.f32 %v418
        %v424 = vfloor.f32 %v419
        %v425 = vfloor.f32 %v420
        %v426 = vfloor.f32 %v421
        %v427 = vfloor.f32 %v422
        %v428 = vmul.f32 %v423, 0.015625
        %v429 = vmul.f32 %v424, 0.015625
        %v430 = vmul.f32 %v425, 0.015625
        %v431 = vmul.f32 %v426, 0.015625
        %v432 = vmul.f32 %v427, 0.015625
        %v433 = vmax.f32 %v428, -8.0
        %v434 = vmax.f32 %v429, -8.0
        %v435 = vmax.f32 %v430, -8.0
        %v436 = vmax.f32 %v431, -8.0
        %v437 = vmax.f32 %v432, -8.0
        %v438 = vmin.f32 %v433, 7.984375
        %v439 = vmin.f32 %v434, 7.984375
        %v440 = vmin.f32 %v435, 7.984375
        %v441 = vmin.f32 %v436, 7.984375
        %v442 = vmin.f32 %v437, 7.984375
        %vm443 = vcmask 64512
        %444 = vst.msk [vmem:[%s200] sm:$0xff] %vm443, %v438
        %445 = vst.msk [vmem:[%s200 + $0x8] sm:$0xff] %vm443, %v439
        %446 = vst.msk [vmem:[%s200 + $0x10] sm:$0xff] %vm443, %v440
        %447 = vst.msk [vmem:[%s200 + $0x18] sm:$0xff] %vm443, %v441
        %448 = vst.msk [vmem:[%s200 + $0x20] sm:$0xff] %vm443, %v442
        %p449 = scmp.lt.s32.totalorder %s21, 1
        %s450 = scalar_select %p449, %s21, 1
        %p451 = scmp.lt.s32.totalorder %s22, 0
        %s452 = scalar_select %p451, %s22, 0
        %s453 = smul.addr %s450, 5
        %s454 = sadd.s32 %s452, %s453
        %s455 = smul.addr %s454, 8
        %s456 = scalar_lea.vmem %s2, %s455
        // Predicated region
        $region37: #{tpu_custom_call.1} parent=27 // pred_check
          %p457 = pneg %p98
        $region38: #{tpu_custom_call.1} parent=27 // pred_check_branch
          %459 = sbr.rel (%p457) target = $region40
        $region39: #{tpu_custom_call.1} parent=27 // pred_region
          _
        $region40: #{tpu_custom_call.1} parent=27 // pred_fallthru
          _
      $region28: #{tpu_custom_call.1} parent=5 // pred_fallthru
        _
      %p460 = scmp.le.s32.totalorder 2, %s12
      // Predicated region
      $region41: #{tpu_custom_call.1} parent=5 // pred_check
        %p461 = pneg %p460
      $region42: #{tpu_custom_call.1} parent=5 // pred_check_branch
        %463 = sbr.rel (%p461) target = $region44
      $region43: #{tpu_custom_call.1} parent=5 // pred_region
        %s464 = ssub.s32 %s12, 2
        // Predicated region
        $region45: #{tpu_custom_call.1} parent=43 // pred_check
          %p465 = pneg %p104
        $region46: #{tpu_custom_call.1} parent=43 // pred_check_branch
          %467 = sbr.rel (%p465) target = $region48
        $region47: #{tpu_custom_call.1} parent=43 // pred_region
          %p468 = scmp.lt.s32.totalorder %s23, 1
          %s469 = scalar_select %p468, %s23, 1
          %p470 = scmp.lt.s32.totalorder %s24, 0
          %s471 = scalar_select %p470, %s24, 0
          %s472 = smul.addr %s469, 5
          %s473 = sadd.s32 %s471, %s472
          %s474 = smul.addr %s473, 8
          %s475 = scalar_lea.vmem %s2, %s474
        $region48: #{tpu_custom_call.1} parent=43 // pred_fallthru
          _
      $region44: #{tpu_custom_call.1} parent=5 // pred_fallthru
        _
    $region6: #{tpu_custom_call.1} parent=1 // loop_footer
      %s16 = sadd.s32 1, %s12
    $region7: #{tpu_custom_call.1} parent=1 // loop_footer_branch
      %11 = sbr.rel target = $region3
    $region8: #{tpu_custom_call.1} parent=1 // loop_exit
      _
    %476 = vsyncpa [#allocation3], 1
    %s477 = scalar_lea.sflag [#allocation3], 1
    %478 = vsyncpa %s477, 1
    %479 = vsyncpa [#allocation5], 1

</llo_original>
